<compile_context>
chip_gen: v5e
topology: v5e:2x2
jax: 0.10.0
libtpu: 0.0.40
codegen_flags: <defaults>
</compile_context>

<pallas_src>
import functools

import numpy as np
import jax
import jax.numpy as jnp
from jax.experimental import pallas as pl
from jax.experimental.pallas import tpu as pltpu

NUM_F1_CLASSES = 3  # f1_score(..., labels=[0, 1, 2], average=None)


def _counts_kernel(logits_ref, labels_ref, out_ref, *,
                   num_channels, tile_rows, height, mask_rows):
    """Writes this tile's per-class [tp, pred_count, label_count] into out_ref[0:3,0:3]."""
    # argmax over the channel dim (ties resolved to the lowest channel index,
    # same as torch.argmax / np.argmax).  logits_ref has shape (C, TH, W).
    # Pure VPU work: (C-1) compares + 2*(C-1) selects per vreg.
    best = logits_ref[0]                      # (TH, W)
    pred = jnp.zeros(best.shape, jnp.int32)
    for c in range(1, num_channels):
        v = logits_ref[c]
        take = v > best
        pred = jnp.where(take, jnp.int32(c), pred)
        best = jnp.where(take, v, best)

    labels = labels_ref[...]                  # (TH, W)

    if mask_rows:
        # Partial edge tile along H: mask out the padded (garbage) rows.
        rows_left = height - pl.program_id(1) * tile_rows
        rid = jax.lax.broadcasted_iota(jnp.int32, labels.shape, 0)
        valid = rid < rows_left
    else:
        valid = None

    # Scatter the 9 scalar counts into a single (8,128) tile so the output
    # store is one full, unmasked lane-dense vst per grid step.
    row = jax.lax.broadcasted_iota(jnp.int32, out_ref.shape, 0)
    col = jax.lax.broadcasted_iota(jnp.int32, out_ref.shape, 1)
    acc = jnp.zeros(out_ref.shape, jnp.float32)
    for c in range(NUM_F1_CLASSES):
        pm = pred == c
        lm = labels == c
        if valid is not None:
            pm = pm & valid
            lm = lm & valid
        tp = jnp.sum((pm & lm).astype(jnp.float32), keepdims=True)    # (1,1)
        pcnt = jnp.sum(pm.astype(jnp.float32), keepdims=True)         # (1,1)
        lcnt = jnp.sum(lm.astype(jnp.float32), keepdims=True)         # (1,1)
        acc = jnp.where((row == c) & (col == 0), tp, acc)
        acc = jnp.where((row == c) & (col == 1), pcnt, acc)
        acc = jnp.where((row == c) & (col == 2), lcnt, acc)
    out_ref[...] = acc


def _choose_row_tile(C, H, W, logits_dtype, labels_dtype,
                     budget_bytes=12 * 1024 * 1024):
    """Largest H-tile (multiple of 8, or full H) whose double-buffered inputs fit the budget."""
    per_row = (C * np.dtype(logits_dtype).itemsize
               + np.dtype(labels_dtype).itemsize) * W
    max_rows = budget_bytes // (2 * per_row)  # x2 for double buffering
    if max_rows >= H:
        return H                              # full dim: no (8) alignment needed
    return int(max(8, (max_rows // 8) * 8))


def _confusion_partials(logits, labels, row_tile=None):
    """Per-(image, row-tile) partial counts, shape (N, T, 8, 128); [:, :, :3, :3] is meaningful."""
    N, C, H, W = logits.shape
    TH = row_tile if row_tile is not None else _choose_row_tile(
        C, H, W, logits.dtype, labels.dtype)
    num_h_tiles = pl.cdiv(H, TH)
    mask_rows = (H % TH) != 0

    kernel = functools.partial(_counts_kernel, num_channels=C, tile_rows=TH,
                               height=H, mask_rows=mask_rows)
    return pl.pallas_call(
        kernel,
        out_shape=jax.ShapeDtypeStruct((N, num_h_tiles, 8, 128), jnp.float32),
        grid=(N, num_h_tiles),
        in_specs=[
            pl.BlockSpec((None, C, TH, W), lambda n, j: (n, 0, j, 0)),
            pl.BlockSpec((None, TH, W), lambda n, j: (n, j, 0)),
        ],
        out_specs=pl.BlockSpec((None, None, 8, 128), lambda n, j: (n, j, 0, 0)),
        compiler_params=pltpu.CompilerParams(
            dimension_semantics=("parallel", "parallel"),
            vmem_limit_bytes=32 * 1024 * 1024),
    )(logits, labels)


def pixelwise_confusion_counts(logits, labels, row_tile=None):
    """Returns a (3, 3) float64 array: rows=classes, cols=[tp, pred_cnt, label_cnt]."""
    partials = np.asarray(
        jax.block_until_ready(_confusion_partials(logits, labels, row_tile)),
        dtype=np.float64)
    return partials[:, :, :NUM_F1_CLASSES, :NUM_F1_CLASSES].sum(axis=(0, 1))


def pixelwise_f1(logits, labels, class_to_watch=None):
    """Mirrors PixelWiseF1.forward (sans remove_small_zones, see TODO above)."""
    counts = pixelwise_confusion_counts(logits, labels)
    tp = counts[:, 0]
    pred_count = counts[:, 1]   # == np.bincount(preds, minlength=3)[0:3]
    label_count = counts[:, 2]  # == np.bincount(labels, minlength=3)[0:3]

    # sklearn f1_score(average=None), zero-division -> 0:
    #   f1_c = 2*tp / (pred_count + label_count)
    denom = pred_count + label_count
    scores = np.where(denom > 0, 2.0 * tp / np.maximum(denom, 1.0), 0.0)

    # class absent from both labels and predictions -> mean of the other scores
    for i in range(NUM_F1_CLASSES):
        if label_count[i] == 0 and pred_count[i] == 0:
            scores[i] = np.delete(scores, i).mean()

    if class_to_watch is None:
        return scores.mean()
    elif class_to_watch == 'loss':
        return 1.0 - scores.mean()
    elif isinstance(class_to_watch, int):
        return scores[class_to_watch]
    else:
        return scores


def _ref_counts(np_logits, np_labels):
    """Host reference for the kernel's confusion counts."""
    np_pred = np.argmax(np_logits, axis=1)
    ref = np.zeros((NUM_F1_CLASSES, NUM_F1_CLASSES), np.float64)
    for c in range(NUM_F1_CLASSES):
        pm = np_pred == c
        lm = np_labels == c
        ref[c] = [np.sum(pm & lm), np.sum(pm), np.sum(lm)]
    return ref


if __name__ == "__main__":
    key = jax.random.PRNGKey(0)
    k1, k2, k3, k4 = jax.random.split(key, 4)

    # Case 1: small shapes, full-height tile (no row masking).
    N, C, H, W = 2, 4, 16, 16
    logits = jax.random.normal(k1, (N, C, H, W), dtype=jnp.float32)
    labels = jax.random.randint(k2, (N, H, W), 0, 3, dtype=jnp.int32)
    counts = pixelwise_confusion_counts(logits, labels)
    np.testing.assert_allclose(
        np.asarray(counts), _ref_counts(np.asarray(logits), np.asarray(labels)),
        rtol=0, atol=0)

    score = pixelwise_f1(logits, labels, class_to_watch=None)
    assert np.isfinite(score)
    loss = pixelwise_f1(logits, labels, class_to_watch='loss')
    assert np.isfinite(loss)

    # Case 2: H not a multiple of the forced row tile -> exercises the masked
    # edge-tile path (TH=8, H=20 -> tiles of 8, 8, 4-valid-rows).
    N2, C2, H2, W2 = 2, 3, 20, 16
    logits2 = jax.random.normal(k3, (N2, C2, H2, W2), dtype=jnp.float32)
    labels2 = jax.random.randint(k4, (N2, H2, W2), 0, 3, dtype=jnp.int32)
    counts2 = pixelwise_confusion_counts(logits2, labels2, row_tile=8)
    np.testing.assert_allclose(
        np.asarray(counts2), _ref_counts(np.asarray(logits2), np.asarray(labels2)),
        rtol=0, atol=0)

    print("KERNEL_OK")
</pallas_src>

<mosaic_0001>
module attributes {stable_mosaic.version = 11 : i64} {
  func.func @_counts_kernel(%arg0: i32, %arg1: i32, %arg2: memref<1x4x16x16xf32, #tpu.memory_space<vmem>>, %arg3: memref<1x16x16xi32, #tpu.memory_space<vmem>>, %arg4: memref<1x1x8x128xf32, #tpu.memory_space<vmem>>) attributes {dimension_semantics = [#tpu.dimension_semantics<parallel>, #tpu.dimension_semantics<parallel>], iteration_bounds = array<i64: 2, 1>, scalar_prefetch = 0 : i64, scratch_operands = 0 : i64, tpu.core_type = #tpu.core_type<tc>, window_params = [{transform_indices = @transform_0, window_bounds = array<i64: 1, 4, 16, 16>}, {transform_indices = @transform_1, window_bounds = array<i64: 1, 16, 16>}, {transform_indices = @transform_2, window_bounds = array<i64: 1, 1, 8, 128>}]} {
    %c0 = arith.constant 0 : index
    %c0_0 = arith.constant 0 : index
    %c0_1 = arith.constant 0 : index
    %c0_2 = arith.constant 0 : index
    %0 = vector.load %arg2[%c0, %c0_0, %c0_1, %c0_2] : memref<1x4x16x16xf32, #tpu.memory_space<vmem>>, vector<1x1x16x16xf32>
    %1 = vector.shape_cast %0 : vector<1x1x16x16xf32> to vector<16x16xf32>
    %c0_i32 = arith.constant 0 : i32
    %2 = vector.broadcast %c0_i32 : i32 to vector<16x16xi32>
    %c0_3 = arith.constant 0 : index
    %c1 = arith.constant 1 : index
    %c0_4 = arith.constant 0 : index
    %c0_5 = arith.constant 0 : index
    %3 = vector.load %arg2[%c0_3, %c1, %c0_4, %c0_5] : memref<1x4x16x16xf32, #tpu.memory_space<vmem>>, vector<1x1x16x16xf32>
    %4 = vector.shape_cast %3 : vector<1x1x16x16xf32> to vector<16x16xf32>
    %5 = arith.cmpf ogt, %4, %1 : vector<16x16xf32>
    %c1_i32 = arith.constant 1 : i32
    %6 = vector.broadcast %c1_i32 : i32 to vector<16x16xi32>
    %7 = arith.select %5, %6, %2 : vector<16x16xi1>, vector<16x16xi32>
    %8 = arith.select %5, %4, %1 : vector<16x16xi1>, vector<16x16xf32>
    %c0_6 = arith.constant 0 : index
    %c2 = arith.constant 2 : index
    %c0_7 = arith.constant 0 : index
    %c0_8 = arith.constant 0 : index
    %9 = vector.load %arg2[%c0_6, %c2, %c0_7, %c0_8] : memref<1x4x16x16xf32, #tpu.memory_space<vmem>>, vector<1x1x16x16xf32>
    %10 = vector.shape_cast %9 : vector<1x1x16x16xf32> to vector<16x16xf32>
    %11 = arith.cmpf ogt, %10, %8 : vector<16x16xf32>
    %c2_i32 = arith.constant 2 : i32
    %12 = vector.broadcast %c2_i32 : i32 to vector<16x16xi32>
    %13 = arith.select %11, %12, %7 : vector<16x16xi1>, vector<16x16xi32>
    %14 = arith.select %11, %10, %8 : vector<16x16xi1>, vector<16x16xf32>
    %c0_9 = arith.constant 0 : index
    %c3 = arith.constant 3 : index
    %c0_10 = arith.constant 0 : index
    %c0_11 = arith.constant 0 : index
    %15 = vector.load %arg2[%c0_9, %c3, %c0_10, %c0_11] : memref<1x4x16x16xf32, #tpu.memory_space<vmem>>, vector<1x1x16x16xf32>
    %16 = vector.shape_cast %15 : vector<1x1x16x16xf32> to vector<16x16xf32>
    %17 = arith.cmpf ogt, %16, %14 : vector<16x16xf32>
    %c3_i32 = arith.constant 3 : i32
    %18 = vector.broadcast %c3_i32 : i32 to vector<16x16xi32>
    %19 = arith.select %17, %18, %13 : vector<16x16xi1>, vector<16x16xi32>
    %c0_12 = arith.constant 0 : index
    %c0_13 = arith.constant 0 : index
    %c0_14 = arith.constant 0 : index
    %20 = vector.load %arg3[%c0_12, %c0_13, %c0_14] : memref<1x16x16xi32, #tpu.memory_space<vmem>>, vector<1x16x16xi32>
    %21 = vector.shape_cast %20 : vector<1x16x16xi32> to vector<16x16xi32>
    %22 = tpu.iota {dimensions = array<i32: 0>} : vector<8x128xi32>
    %23 = tpu.iota {dimensions = array<i32: 1>} : vector<8x128xi32>
    %cst = arith.constant 0.000000e+00 : f32
    %24 = vector.broadcast %cst : f32 to vector<8x128xf32>
    %c0_i32_15 = arith.constant 0 : i32
    %25 = vector.broadcast %c0_i32_15 : i32 to vector<16x16xi32>
    %26 = arith.cmpi eq, %19, %25 : vector<16x16xi32>
    %c0_i32_16 = arith.constant 0 : i32
    %27 = vector.broadcast %c0_i32_16 : i32 to vector<16x16xi32>
    %28 = arith.cmpi eq, %21, %27 : vector<16x16xi32>
    %29 = arith.andi %26, %28 : vector<16x16xi1>
    %30 = arith.extui %29 : vector<16x16xi1> to vector<16x16xi32>
    %31 = arith.sitofp %30 : vector<16x16xi32> to vector<16x16xf32>
    %32 = vector.shape_cast %31 : vector<16x16xf32> to vector<1x16x16xf32>
    %cst_17 = arith.constant dense<0.000000e+00> : vector<1xf32>
    %33 = vector.multi_reduction <add>, %32, %cst_17 [1, 2] : vector<1x16x16xf32> to vector<1xf32>
    %34 = vector.shape_cast %33 : vector<1xf32> to vector<1x1x1xf32>
    %35 = vector.extract %34[0, 0, 0] : f32 from vector<1x1x1xf32>
    %36 = vector.broadcast %35 : f32 to vector<1x1xf32>
    %37 = arith.extui %26 : vector<16x16xi1> to vector<16x16xi32>
    %38 = arith.sitofp %37 : vector<16x16xi32> to vector<16x16xf32>
    %39 = vector.shape_cast %38 : vector<16x16xf32> to vector<1x16x16xf32>
    %cst_18 = arith.constant dense<0.000000e+00> : vector<1xf32>
    %40 = vector.multi_reduction <add>, %39, %cst_18 [1, 2] : vector<1x16x16xf32> to vector<1xf32>
    %41 = vector.shape_cast %40 : vector<1xf32> to vector<1x1x1xf32>
    %42 = vector.extract %41[0, 0, 0] : f32 from vector<1x1x1xf32>
    %43 = vector.broadcast %42 : f32 to vector<1x1xf32>
    %44 = arith.extui %28 : vector<16x16xi1> to vector<16x16xi32>
    %45 = arith.sitofp %44 : vector<16x16xi32> to vector<16x16xf32>
    %46 = vector.shape_cast %45 : vector<16x16xf32> to vector<1x16x16xf32>
    %cst_19 = arith.constant dense<0.000000e+00> : vector<1xf32>
    %47 = vector.multi_reduction <add>, %46, %cst_19 [1, 2] : vector<1x16x16xf32> to vector<1xf32>
    %48 = vector.shape_cast %47 : vector<1xf32> to vector<1x1x1xf32>
    %49 = vector.extract %48[0, 0, 0] : f32 from vector<1x1x1xf32>
    %50 = vector.broadcast %49 : f32 to vector<1x1xf32>
    %c0_i32_20 = arith.constant 0 : i32
    %51 = vector.broadcast %c0_i32_20 : i32 to vector<8x128xi32>
    %52 = arith.cmpi eq, %22, %51 : vector<8x128xi32>
    %c0_i32_21 = arith.constant 0 : i32
    %53 = vector.broadcast %c0_i32_21 : i32 to vector<8x128xi32>
    %54 = arith.cmpi eq, %23, %53 : vector<8x128xi32>
    %55 = arith.andi %52, %54 : vector<8x128xi1>
    %56 = vector.shape_cast %36 : vector<1x1xf32> to vector<1x1xf32>
    %57 = vector.broadcast %56 : vector<1x1xf32> to vector<8x128xf32>
    %58 = arith.select %55, %57, %24 : vector<8x128xi1>, vector<8x128xf32>
    %c0_i32_22 = arith.constant 0 : i32
    %59 = vector.broadcast %c0_i32_22 : i32 to vector<8x128xi32>
    %60 = arith.cmpi eq, %22, %59 : vector<8x128xi32>
    %c1_i32_23 = arith.constant 1 : i32
    %61 = vector.broadcast %c1_i32_23 : i32 to vector<8x128xi32>
    %62 = arith.cmpi eq, %23, %61 : vector<8x128xi32>
    %63 = arith.andi %60, %62 : vector<8x128xi1>
    %64 = vector.shape_cast %43 : vector<1x1xf32> to vector<1x1xf32>
    %65 = vector.broadcast %64 : vector<1x1xf32> to vector<8x128xf32>
    %66 = arith.select %63, %65, %58 : vector<8x128xi1>, vector<8x128xf32>
    %c0_i32_24 = arith.constant 0 : i32
    %67 = vector.broadcast %c0_i32_24 : i32 to vector<8x128xi32>
    %68 = arith.cmpi eq, %22, %67 : vector<8x128xi32>
    %c2_i32_25 = arith.constant 2 : i32
    %69 = vector.broadcast %c2_i32_25 : i32 to vector<8x128xi32>
    %70 = arith.cmpi eq, %23, %69 : vector<8x128xi32>
    %71 = arith.andi %68, %70 : vector<8x128xi1>
    %72 = vector.shape_cast %50 : vector<1x1xf32> to vector<1x1xf32>
    %73 = vector.broadcast %72 : vector<1x1xf32> to vector<8x128xf32>
    %74 = arith.select %71, %73, %66 : vector<8x128xi1>, vector<8x128xf32>
    %c1_i32_26 = arith.constant 1 : i32
    %75 = vector.broadcast %c1_i32_26 : i32 to vector<16x16xi32>
    %76 = arith.cmpi eq, %19, %75 : vector<16x16xi32>
    %c1_i32_27 = arith.constant 1 : i32
    %77 = vector.broadcast %c1_i32_27 : i32 to vector<16x16xi32>
    %78 = arith.cmpi eq, %21, %77 : vector<16x16xi32>
    %79 = arith.andi %76, %78 : vector<16x16xi1>
    %80 = arith.extui %79 : vector<16x16xi1> to vector<16x16xi32>
    %81 = arith.sitofp %80 : vector<16x16xi32> to vector<16x16xf32>
    %82 = vector.shape_cast %81 : vector<16x16xf32> to vector<1x16x16xf32>
    %cst_28 = arith.constant dense<0.000000e+00> : vector<1xf32>
    %83 = vector.multi_reduction <add>, %82, %cst_28 [1, 2] : vector<1x16x16xf32> to vector<1xf32>
    %84 = vector.shape_cast %83 : vector<1xf32> to vector<1x1x1xf32>
    %85 = vector.extract %84[0, 0, 0] : f32 from vector<1x1x1xf32>
    %86 = vector.broadcast %85 : f32 to vector<1x1xf32>
    %87 = arith.extui %76 : vector<16x16xi1> to vector<16x16xi32>
    %88 = arith.sitofp %87 : vector<16x16xi32> to vector<16x16xf32>
    %89 = vector.shape_cast %88 : vector<16x16xf32> to vector<1x16x16xf32>
    %cst_29 = arith.constant dense<0.000000e+00> : vector<1xf32>
    %90 = vector.multi_reduction <add>, %89, %cst_29 [1, 2] : vector<1x16x16xf32> to vector<1xf32>
    %91 = vector.shape_cast %90 : vector<1xf32> to vector<1x1x1xf32>
    %92 = vector.extract %91[0, 0, 0] : f32 from vector<1x1x1xf32>
    %93 = vector.broadcast %92 : f32 to vector<1x1xf32>
    %94 = arith.extui %78 : vector<16x16xi1> to vector<16x16xi32>
    %95 = arith.sitofp %94 : vector<16x16xi32> to vector<16x16xf32>
    %96 = vector.shape_cast %95 : vector<16x16xf32> to vector<1x16x16xf32>
    %cst_30 = arith.constant dense<0.000000e+00> : vector<1xf32>
    %97 = vector.multi_reduction <add>, %96, %cst_30 [1, 2] : vector<1x16x16xf32> to vector<1xf32>
    %98 = vector.shape_cast %97 : vector<1xf32> to vector<1x1x1xf32>
    %99 = vector.extract %98[0, 0, 0] : f32 from vector<1x1x1xf32>
    %100 = vector.broadcast %99 : f32 to vector<1x1xf32>
    %c1_i32_31 = arith.constant 1 : i32
    %101 = vector.broadcast %c1_i32_31 : i32 to vector<8x128xi32>
    %102 = arith.cmpi eq, %22, %101 : vector<8x128xi32>
    %c0_i32_32 = arith.constant 0 : i32
    %103 = vector.broadcast %c0_i32_32 : i32 to vector<8x128xi32>
    %104 = arith.cmpi eq, %23, %103 : vector<8x128xi32>
    %105 = arith.andi %102, %104 : vector<8x128xi1>
    %106 = vector.shape_cast %86 : vector<1x1xf32> to vector<1x1xf32>
    %107 = vector.broadcast %106 : vector<1x1xf32> to vector<8x128xf32>
    %108 = arith.select %105, %107, %74 : vector<8x128xi1>, vector<8x128xf32>
    %c1_i32_33 = arith.constant 1 : i32
    %109 = vector.broadcast %c1_i32_33 : i32 to vector<8x128xi32>
    %110 = arith.cmpi eq, %22, %109 : vector<8x128xi32>
    %c1_i32_34 = arith.constant 1 : i32
    %111 = vector.broadcast %c1_i32_34 : i32 to vector<8x128xi32>
    %112 = arith.cmpi eq, %23, %111 : vector<8x128xi32>
    %113 = arith.andi %110, %112 : vector<8x128xi1>
    %114 = vector.shape_cast %93 : vector<1x1xf32> to vector<1x1xf32>
    %115 = vector.broadcast %114 : vector<1x1xf32> to vector<8x128xf32>
    %116 = arith.select %113, %115, %108 : vector<8x128xi1>, vector<8x128xf32>
    %c1_i32_35 = arith.constant 1 : i32
    %117 = vector.broadcast %c1_i32_35 : i32 to vector<8x128xi32>
    %118 = arith.cmpi eq, %22, %117 : vector<8x128xi32>
    %c2_i32_36 = arith.constant 2 : i32
    %119 = vector.broadcast %c2_i32_36 : i32 to vector<8x128xi32>
    %120 = arith.cmpi eq, %23, %119 : vector<8x128xi32>
    %121 = arith.andi %118, %120 : vector<8x128xi1>
    %122 = vector.shape_cast %100 : vector<1x1xf32> to vector<1x1xf32>
    %123 = vector.broadcast %122 : vector<1x1xf32> to vector<8x128xf32>
    %124 = arith.select %121, %123, %116 : vector<8x128xi1>, vector<8x128xf32>
    %c2_i32_37 = arith.constant 2 : i32
    %125 = vector.broadcast %c2_i32_37 : i32 to vector<16x16xi32>
    %126 = arith.cmpi eq, %19, %125 : vector<16x16xi32>
    %c2_i32_38 = arith.constant 2 : i32
    %127 = vector.broadcast %c2_i32_38 : i32 to vector<16x16xi32>
    %128 = arith.cmpi eq, %21, %127 : vector<16x16xi32>
    %129 = arith.andi %126, %128 : vector<16x16xi1>
    %130 = arith.extui %129 : vector<16x16xi1> to vector<16x16xi32>
    %131 = arith.sitofp %130 : vector<16x16xi32> to vector<16x16xf32>
    %132 = vector.shape_cast %131 : vector<16x16xf32> to vector<1x16x16xf32>
    %cst_39 = arith.constant dense<0.000000e+00> : vector<1xf32>
    %133 = vector.multi_reduction <add>, %132, %cst_39 [1, 2] : vector<1x16x16xf32> to vector<1xf32>
    %134 = vector.shape_cast %133 : vector<1xf32> to vector<1x1x1xf32>
    %135 = vector.extract %134[0, 0, 0] : f32 from vector<1x1x1xf32>
    %136 = vector.broadcast %135 : f32 to vector<1x1xf32>
    %137 = arith.extui %126 : vector<16x16xi1> to vector<16x16xi32>
    %138 = arith.sitofp %137 : vector<16x16xi32> to vector<16x16xf32>
    %139 = vector.shape_cast %138 : vector<16x16xf32> to vector<1x16x16xf32>
    %cst_40 = arith.constant dense<0.000000e+00> : vector<1xf32>
    %140 = vector.multi_reduction <add>, %139, %cst_40 [1, 2] : vector<1x16x16xf32> to vector<1xf32>
    %141 = vector.shape_cast %140 : vector<1xf32> to vector<1x1x1xf32>
    %142 = vector.extract %141[0, 0, 0] : f32 from vector<1x1x1xf32>
    %143 = vector.broadcast %142 : f32 to vector<1x1xf32>
    %144 = arith.extui %128 : vector<16x16xi1> to vector<16x16xi32>
    %145 = arith.sitofp %144 : vector<16x16xi32> to vector<16x16xf32>
    %146 = vector.shape_cast %145 : vector<16x16xf32> to vector<1x16x16xf32>
    %cst_41 = arith.constant dense<0.000000e+00> : vector<1xf32>
    %147 = vector.multi_reduction <add>, %146, %cst_41 [1, 2] : vector<1x16x16xf32> to vector<1xf32>
    %148 = vector.shape_cast %147 : vector<1xf32> to vector<1x1x1xf32>
    %149 = vector.extract %148[0, 0, 0] : f32 from vector<1x1x1xf32>
    %150 = vector.broadcast %149 : f32 to vector<1x1xf32>
    %c2_i32_42 = arith.constant 2 : i32
    %151 = vector.broadcast %c2_i32_42 : i32 to vector<8x128xi32>
    %152 = arith.cmpi eq, %22, %151 : vector<8x128xi32>
    %c0_i32_43 = arith.constant 0 : i32
    %153 = vector.broadcast %c0_i32_43 : i32 to vector<8x128xi32>
    %154 = arith.cmpi eq, %23, %153 : vector<8x128xi32>
    %155 = arith.andi %152, %154 : vector<8x128xi1>
    %156 = vector.shape_cast %136 : vector<1x1xf32> to vector<1x1xf32>
    %157 = vector.broadcast %156 : vector<1x1xf32> to vector<8x128xf32>
    %158 = arith.select %155, %157, %124 : vector<8x128xi1>, vector<8x128xf32>
    %c2_i32_44 = arith.constant 2 : i32
    %159 = vector.broadcast %c2_i32_44 : i32 to vector<8x128xi32>
    %160 = arith.cmpi eq, %22, %159 : vector<8x128xi32>
    %c1_i32_45 = arith.constant 1 : i32
    %161 = vector.broadcast %c1_i32_45 : i32 to vector<8x128xi32>
    %162 = arith.cmpi eq, %23, %161 : vector<8x128xi32>
    %163 = arith.andi %160, %162 : vector<8x128xi1>
    %164 = vector.shape_cast %143 : vector<1x1xf32> to vector<1x1xf32>
    %165 = vector.broadcast %164 : vector<1x1xf32> to vector<8x128xf32>
    %166 = arith.select %163, %165, %158 : vector<8x128xi1>, vector<8x128xf32>
    %c2_i32_46 = arith.constant 2 : i32
    %167 = vector.broadcast %c2_i32_46 : i32 to vector<8x128xi32>
    %168 = arith.cmpi eq, %22, %167 : vector<8x128xi32>
    %c2_i32_47 = arith.constant 2 : i32
    %169 = vector.broadcast %c2_i32_47 : i32 to vector<8x128xi32>
    %170 = arith.cmpi eq, %23, %169 : vector<8x128xi32>
    %171 = arith.andi %168, %170 : vector<8x128xi1>
    %172 = vector.shape_cast %150 : vector<1x1xf32> to vector<1x1xf32>
    %173 = vector.broadcast %172 : vector<1x1xf32> to vector<8x128xf32>
    %174 = arith.select %171, %173, %166 : vector<8x128xi1>, vector<8x128xf32>
    %c0_48 = arith.constant 0 : index
    %c0_49 = arith.constant 0 : index
    %c0_50 = arith.constant 0 : index
    %c0_51 = arith.constant 0 : index
    %175 = vector.load %arg4[%c0_48, %c0_49, %c0_50, %c0_51] : memref<1x1x8x128xf32, #tpu.memory_space<vmem>>, vector<1x1x8x128xf32>
    %176 = vector.shape_cast %175 : vector<1x1x8x128xf32> to vector<8x128xf32>
    %177 = vector.shape_cast %174 : vector<8x128xf32> to vector<1x1x8x128xf32>
    tpu.vector_store %arg4[%c0_48, %c0_49, %c0_50, %c0_51], %177 {strides = array<i32>} : memref<1x1x8x128xf32, #tpu.memory_space<vmem>>, vector<1x1x8x128xf32>,
    return
  }
  func.func @transform_0(%arg0: i32, %arg1: i32) -> (i32, i32, i32, i32) {
    %c0_i32 = arith.constant 0 : i32
    %c0_i32_0 = arith.constant 0 : i32
    %c0_i32_1 = arith.constant 0 : i32
    return %arg0, %c0_i32, %arg1, %c0_i32_0 : i32, i32, i32, i32
  }
  func.func @transform_1(%arg0: i32, %arg1: i32) -> (i32, i32, i32) {
    %c0_i32 = arith.constant 0 : i32
    %c0_i32_0 = arith.constant 0 : i32
    return %arg0, %arg1, %c0_i32 : i32, i32, i32
  }
  func.func @transform_2(%arg0: i32, %arg1: i32) -> (i32, i32, i32, i32) {
    %c0_i32 = arith.constant 0 : i32
    %c0_i32_0 = arith.constant 0 : i32
    %c0_i32_1 = arith.constant 0 : i32
    return %arg0, %arg1, %c0_i32, %c0_i32_0 : i32, i32, i32, i32
  }
}

</mosaic_0001>

<llo_original>
// kernel: tpu_custom_call.1
$region0: #{tpu_custom_call.1}
  #allocation0 [shape = 'u32[]', space=smem, size = 0x4, offset = 0x4, fixed_abs, tag = 'smem constant byte address 0x4 - core index']
  #allocation1 [shape = 'u32[72,128]{1,0:T(1,128)}', space=vmem, size = 0x9000, scoped, tag = 'internal scratch']
  %s0 = inlined_call_operand.hbm [shape: f32[2,4,16,16], index: 0, kind: input, shape index: {}]
  %s1 = inlined_call_operand.hbm [shape: s32[2,16,16], index: 1, kind: input, shape index: {}]
  %s2 = inlined_call_operand.hbm [shape: f32[2,1,8,128], index: 2, kind: output, shape index: {}]
  %s3 = sld [smem:[#allocation0]]
  $region49: #{tpu_custom_call.1} parent=0
    _
  %s5 = ssub.s32 1, %s3
  %s6 = scalar_select 0, %s5, %s3
  $region1: #{tpu_custom_call.1} parent=0
    #allocation2 [shape = 'u8[65536]{0}', space=vmem, size = 0x10000, scoped, tag = 'input window, operand 0']
    #allocation3 [shape = 's32[2]{0}', space=sflag, size = 0x8, scoped, tag = 'scoped memory for tpu_custom_call.1']
    #allocation4 [shape = 's32[2]{0}', space=sflag, size = 0x8, scoped, tag = 'scoped memory for tpu_custom_call.1']
    #allocation5 [shape = 'u8[16384]{0}', space=vmem, size = 0x4000, scoped, tag = 'input window, operand 1']
    #allocation6 [shape = 's32[2]{0}', space=sflag, size = 0x8, scoped, tag = 'scoped memory for tpu_custom_call.1']
    #allocation7 [shape = 'u8[8192]{0}', space=vmem, size = 0x2000, scoped, tag = 'output window, operand 0']
    %7 = vsyncpa [#allocation3], 0
    %s8 = scalar_lea.sflag [#allocation3], 1
    %9 = vsyncpa %s8, 0
    %10 = vsyncpa [#allocation6], 0
    %s11 = scalar_lea.sflag [#allocation6], 1
    %12 = vsyncpa %s11, 0
    %13 = vsyncpa [#allocation4], 0
    %s14 = scalar_lea.sflag [#allocation4], 1
    %15 = vsyncpa %s14, 0
    loop: start=0, step=1, limit=4
    $region2: #{tpu_custom_call.1} parent=1 // loop_pre_header
      _
    $region3: #{tpu_custom_call.1} parent=1 // loop_header
      %s17 = sphi 0, %s21
      %p18 = scmp.ge.s32.totalorder %s17, 4
      %s24 = sphi 0, %s36
      %s25 = sphi 0, %s32
      %s26 = sphi 0, %s24
      %s27 = sphi 0, %s25
      %s28 = sphi 0, %s26
      %s29 = sphi 0, %s27
      %s41 = sphi 0, %s43
      %s44 = sphi 0, %s41
      %s45 = sphi 0, %s44
      %s61 = sphi 0, %s45
      %s69 = sphi 0, %s71
      %s72 = sphi 0, %s69
      %s73 = sphi 0, %s72
      %s89 = sphi 0, %s73
      %s97 = sphi 0, %s99
      %s100 = sphi 0, %s97
      %s101 = sphi 0, %s100
      %s117 = sphi 0, %s101
    $region4: #{tpu_custom_call.1} parent=1 // loop_header_branch
      %20 = sbr.rel (%p18) target = $region8
    $region5: #{tpu_custom_call.1} parent=1 // loop_body
      %s22 = ssub.s32 %s17, 1
      %s23 = ssub.s32 %s17, 2
      %s30 = sadd.s32 1, %s25
      %p31 = scmp.ge.s32.totalorder %s30, 1
      %s32 = scalar_select %p31, 0, %s30
      %s33 = sadd.s32 1, %s24
      %s34 = scalar_select %p31, %s33, %s24
      %p35 = scmp.ge.s32.totalorder %s34, 2
      %s36 = scalar_select %p35, 0, %s34
      %s37 = ssub.s32 %s24, %s36
      %s38 = ssub.s32 %s25, %s32
      %s39 = sor.u32 %s37, %s38
      %p40 = scmp.eq.s32.totalorder %s39, 0
      %s42 = sadd.s32 %s41, 1
      %s43 = scalar_select %p40, %s41, %s42
      %p46 = pneg %p40
      %p47 = scmp.eq.s32.totalorder %s17, 1
      %p48 = por %p46, %p47
      %p49 = scmp.ne.s32.totalorder %s41, %s44
      %p50 = scmp.eq.s32.totalorder %s17, 0
      %p51 = por %p49, %p50
      %p52 = scmp.ne.s32.totalorder %s41, %s44
      %p53 = scmp.eq.s32.totalorder %s22, 1
      %p54 = por %p52, %p53
      %p55 = scmp.ne.s32.totalorder %s44, %s45
      %p56 = scmp.eq.s32.totalorder %s22, 0
      %p57 = por %p55, %p56
      %p58 = scmp.ne.s32.totalorder %s44, %s45
      %p59 = scmp.eq.s32.totalorder %s23, 1
      %p60 = por %p58, %p59
      %p62 = scmp.ne.s32.totalorder %s45, %s61
      %p63 = scmp.eq.s32.totalorder %s23, 0
      %p64 = por %p62, %p63
      %s65 = ssub.s32 %s24, %s36
      %s66 = ssub.s32 %s25, %s32
      %s67 = sor.u32 %s65, %s66
      %p68 = scmp.eq.s32.totalorder %s67, 0
      %s70 = sadd.s32 %s69, 1
      %s71 = scalar_select %p68, %s69, %s70
      %p74 = pneg %p68
      %p75 = scmp.eq.s32.totalorder %s17, 1
      %p76 = por %p74, %p75
      %p77 = scmp.ne.s32.totalorder %s69, %s72
      %p78 = scmp.eq.s32.totalorder %s17, 0
      %p79 = por %p77, %p78
      %p80 = scmp.ne.s32.totalorder %s69, %s72
      %p81 = scmp.eq.s32.totalorder %s22, 1
      %p82 = por %p80, %p81
      %p83 = scmp.ne.s32.totalorder %s72, %s73
      %p84 = scmp.eq.s32.totalorder %s22, 0
      %p85 = por %p83, %p84
      %p86 = scmp.ne.s32.totalorder %s72, %s73
      %p87 = scmp.eq.s32.totalorder %s23, 1
      %p88 = por %p86, %p87
      %p90 = scmp.ne.s32.totalorder %s73, %s89
      %p91 = scmp.eq.s32.totalorder %s23, 0
      %p92 = por %p90, %p91
      %s93 = ssub.s32 %s24, %s36
      %s94 = ssub.s32 %s25, %s32
      %s95 = sor.u32 %s93, %s94
      %p96 = scmp.eq.s32.totalorder %s95, 0
      %s98 = sadd.s32 %s97, 1
      %s99 = scalar_select %p96, %s97, %s98
      %p102 = pneg %p96
      %p103 = scmp.eq.s32.totalorder %s17, 1
      %p104 = por %p102, %p103
      %p105 = scmp.ne.s32.totalorder %s97, %s100
      %p106 = scmp.eq.s32.totalorder %s17, 0
      %p107 = por %p105, %p106
      %p108 = scmp.ne.s32.totalorder %s97, %s100
      %p109 = scmp.eq.s32.totalorder %s22, 1
      %p110 = por %p108, %p109
      %p111 = scmp.ne.s32.totalorder %s100, %s101
      %p112 = scmp.eq.s32.totalorder %s22, 0
      %p113 = por %p111, %p112
      %p114 = scmp.ne.s32.totalorder %s100, %s101
      %p115 = scmp.eq.s32.totalorder %s23, 1
      %p116 = por %p114, %p115
      %p118 = scmp.ne.s32.totalorder %s101, %s117
      %p119 = scmp.eq.s32.totalorder %s23, 0
      %p120 = por %p118, %p119
      %p121 = scmp.le.s32.totalorder 1, %s17
      %p122 = scmp.lt.s32.totalorder %s17, 3
      %p123 = pnand %p121, %p122
      %p124 = pneg %p123
      // Predicated region
      $region9: #{tpu_custom_call.1} parent=5 // pred_check
        _
      $region10: #{tpu_custom_call.1} parent=5 // pred_check_branch
        %126 = sbr.rel (%p123) target = $region12
      $region11: #{tpu_custom_call.1} parent=5 // pred_region
        %s127 = ssub.s32 %s17, 1
      $region12: #{tpu_custom_call.1} parent=5 // pred_fallthru
        _
      %p128 = scmp.lt.s32.totalorder %s17, 2
      // Predicated region
      $region13: #{tpu_custom_call.1} parent=5 // pred_check
        %p129 = pneg %p128
      $region14: #{tpu_custom_call.1} parent=5 // pred_check_branch
        %131 = sbr.rel (%p129) target = $region16
      $region15: #{tpu_custom_call.1} parent=5 // pred_region
        // Predicated region
        $region17: #{tpu_custom_call.1} parent=15 // pred_check
          %p132 = pneg %p51
        $region18: #{tpu_custom_call.1} parent=15 // pred_check_branch
          %134 = sbr.rel (%p132) target = $region20
        $region19: #{tpu_custom_call.1} parent=15 // pred_region
          %s135 = sand.u32 %s41, 1
          %s136 = scalar_lea.sflag [#allocation3], %s135
          %s137 = sand.u32 %s41, 1
          %s138 = smul.addr %s137, 64
          %s139 = scalar_lea.vmem [#allocation2], %s138
          %s140 = smul.u32 2, %s25
          %142 = vsyncadd %s136, 0
          %s143 = smul.addr %s24, 8
          %s144 = sadd.s32 %s140, %s143
          %s145 = smul.addr %s144, 8
          %s146 = scalar_lea.hbm %s0, %s145
          %s147 = sshll.u32 %s146, 4
          %s148 = int_to_ptr.hbm [resolvable:$true] %s147
          %s149 = sshll.u32 %s139, 4
          %s150 = int_to_ptr.vmem [resolvable:$true] %s149
          %155 = dma.hbm_to_vmem [thread:$0]  %s148, 1024, %s150, %s136, 128, 128, 8
        $region20: #{tpu_custom_call.1} parent=15 // pred_fallthru
          _
        // Predicated region
        $region21: #{tpu_custom_call.1} parent=15 // pred_check
          %p156 = pneg %p79
        $region22: #{tpu_custom_call.1} parent=15 // pred_check_branch
          %158 = sbr.rel (%p156) target = $region24
        $region23: #{tpu_custom_call.1} parent=15 // pred_region
          %s159 = sand.u32 %s69, 1
          %s160 = scalar_lea.sflag [#allocation6], %s159
          %s161 = sand.u32 %s69, 1
          %s162 = smul.addr %s161, 16
          %s163 = scalar_lea.vmem [#allocation5], %s162
          %s164 = smul.u32 2, %s25
          %166 = vsyncadd %s160, 0
          %s167 = smul.addr %s24, 2
          %s168 = sadd.s32 %s164, %s167
          %s169 = smul.addr %s168, 8
          %s170 = scalar_lea.hbm %s1, %s169
          %s171 = sshll.u32 %s170, 4
          %s172 = int_to_ptr.hbm [resolvable:$true] %s171
          %s173 = sshll.u32 %s163, 4
          %s174 = int_to_ptr.vmem [resolvable:$true] %s173
          %179 = dma.hbm_to_vmem [thread:$0]  %s172, 256, %s174, %s160, 128, 128, 8
        $region24: #{tpu_custom_call.1} parent=15 // pred_fallthru
          _
      $region16: #{tpu_custom_call.1} parent=5 // pred_fallthru
        _
      %p180 = scmp.le.s32.totalorder 1, %s17
      %p181 = scmp.lt.s32.totalorder %s17, 3
      %p182 = pnand %p180, %p181
      %p183 = pneg %p182
      // Predicated region
      $region25: #{tpu_custom_call.1} parent=5 // pred_check
        _
      $region26: #{tpu_custom_call.1} parent=5 // pred_check_branch
        %185 = sbr.rel (%p182) target = $region28
      $region27: #{tpu_custom_call.1} parent=5 // pred_region
        %s186 = ssub.s32 %s17, 1
        %s187 = sand.u32 %s44, 1
        %s188 = scalar_lea.sflag [#allocation3], %s187
        %s189 = sand.u32 %s44, 1
        %s190 = smul.addr %s189, 64
        %s191 = scalar_lea.vmem [#allocation2], %s190
        // Predicated region
        $region29: #{tpu_custom_call.1} parent=27 // pred_check
          %p192 = pneg %p57
        $region30: #{tpu_custom_call.1} parent=27 // pred_check_branch
          %194 = sbr.rel (%p192) target = $region32
        $region31: #{tpu_custom_call.1} parent=27 // pred_region
          %196 = dma.done %s188, 1024
        $region32: #{tpu_custom_call.1} parent=27 // pred_fallthru
          _
        %s197 = sand.u32 %s72, 1
        %s198 = scalar_lea.sflag [#allocation6], %s197
        %s199 = sand.u32 %s72, 1
        %s200 = smul.addr %s199, 16
        %s201 = scalar_lea.vmem [#allocation5], %s200
        // Predicated region
        $region33: #{tpu_custom_call.1} parent=27 // pred_check
          %p202 = pneg %p85
        $region34: #{tpu_custom_call.1} parent=27 // pred_check_branch
          %204 = sbr.rel (%p202) target = $region36
        $region35: #{tpu_custom_call.1} parent=27 // pred_region
          %206 = dma.done %s198, 256
        $region36: #{tpu_custom_call.1} parent=27 // pred_fallthru
          _
        %s207 = sand.u32 %s44, 1
        %s208 = scalar_lea.sflag [#allocation3], %s207
        %s209 = sand.u32 %s44, 1
        %s210 = smul.addr %s209, 64
        %s211 = scalar_lea.vmem [#allocation2], %s210
        %p212 = pneg %p57
        %p213 = pneg %p54
        %s214 = sand.u32 %s72, 1
        %s215 = scalar_lea.sflag [#allocation6], %s214
        %s216 = sand.u32 %s72, 1
        %s217 = smul.addr %s216, 16
        %s218 = scalar_lea.vmem [#allocation5], %s217
        %p219 = pneg %p85
        %p220 = pneg %p82
        %p221 = pneg %p113
        %p222 = pneg %p110
        %s223 = sand.u32 %s100, 1
        %s224 = scalar_lea.sflag [#allocation4], %s223
        %s225 = sand.u32 %s100, 1
        %s226 = smul.addr %s225, 8
        %s227 = scalar_lea.vmem [#allocation7], %s226
        %s228 = smul.u32 2, %s27
        %s229 = smul.u32 2, %s27
        %v230 = vld [vmem:[%s191] sm:$0xff]
        %v231 = vld [vmem:[%s191 + $0x8] sm:$0xff]
        %s232 = scalar_lea.vmem %s191, 16 [#allocation2]
        %v233 = vld [vmem:[%s232] sm:$0xff]
        %v234 = vld [vmem:[%s232 + $0x8] sm:$0xff]
        %vm235 = vcmp.gt.f32.partialorder %v233, %v230
        %vm236 = vcmp.gt.f32.partialorder %v234, %v231
        %v237 = vsel %vm235, 1, 0
        %v238 = vsel %vm236, 1, 0
        %v239 = vsel %vm235, %v233, %v230
        %v240 = vsel %vm236, %v234, %v231
        %s241 = scalar_lea.vmem %s191, 32 [#allocation2]
        %v242 = vld [vmem:[%s241] sm:$0xff]
        %v243 = vld [vmem:[%s241 + $0x8] sm:$0xff]
        %vm244 = vcmp.gt.f32.partialorder %v242, %v239
        %vm245 = vcmp.gt.f32.partialorder %v243, %v240
        %v246 = vsel %vm244, 2, %v237
        %v247 = vsel %vm245, 2, %v238
        %v248 = vsel %vm244, %v242, %v239
        %v249 = vsel %vm245, %v243, %v240
        %s250 = scalar_lea.vmem %s191, 48 [#allocation2]
        %v251 = vld [vmem:[%s250] sm:$0xff]
        %v252 = vld [vmem:[%s250 + $0x8] sm:$0xff]
        %vm253 = vcmp.gt.f32.partialorder %v251, %v248
        %vm254 = vcmp.gt.f32.partialorder %v252, %v249
        %v255 = vsel %vm253, 3, %v246
        %v256 = vsel %vm254, 3, %v247
        %v257 = vld [vmem:[%s201] sm:$0xff]
        %v258 = vld [vmem:[%s201 + $0x8] sm:$0xff]
        %v259 = vlaneseq
        %v260 = vshrl.u32 %v259, 7
        %v261 = vlaneseq
        %v262 = vand.u32 %v261, 127
        %vm263 = vcmp.eq.s32.totalorder %v255, 0
        %vm264 = vcmp.eq.s32.totalorder %v256, 0
        %vm265 = vcmp.eq.s32.totalorder %v257, 0
        %vm266 = vcmp.eq.s32.totalorder %v258, 0
        %vm267 = vmand %vm263, %vm265
        %vm268 = vmand %vm264, %vm266
        %v269 = vsel %vm267, 1, 0
        %v270 = vsel %vm268, 1, 0
        %v271 = vcvt.s32.f32 %v269
        %v272 = vcvt.s32.f32 %v270
        %vm273 = vcmask 130048
        %v274 = vsel %vm273, %v271, 0.0
        %v275 = vsel %vm273, %v272, 0.0
        %v276 = vadd.f32 %v274, %v275
        %277 = vadd.xlane.f32.xlu0 %v276
        %v278 = vpop.xlane.xlu0 %277
        %v279 = vrot.slane %v278, 4
        %v280 = vadd.f32 %v278, %v279
        %v281 = vrot.slane %v280, 2
        %v282 = vadd.f32 %v280, %v281
        %v283 = vrot.slane %v282, 1
        %v284 = vadd.f32 %v282, %v283
        %s285 = vtos %v284
        %v286 = vsel %vm263, 1, 0
        %v287 = vsel %vm264, 1, 0
        %v288 = vcvt.s32.f32 %v286
        %v289 = vcvt.s32.f32 %v287
        %v290 = vsel %vm273, %v288, 0.0
        %v291 = vsel %vm273, %v289, 0.0
        %v292 = vadd.f32 %v290, %v291
        %293 = vadd.xlane.f32.xlu0 %v292
        %v294 = vpop.xlane.xlu0 %293
        %v295 = vrot.slane %v294, 4
        %v296 = vadd.f32 %v294, %v295
        %v297 = vrot.slane %v296, 2
        %v298 = vadd.f32 %v296, %v297
        %v299 = vrot.slane %v298, 1
        %v300 = vadd.f32 %v298, %v299
        %s301 = vtos %v300
        %v302 = vsel %vm265, 1, 0
        %v303 = vsel %vm266, 1, 0
        %v304 = vcvt.s32.f32 %v302
        %v305 = vcvt.s32.f32 %v303
        %v306 = vsel %vm273, %v304, 0.0
        %v307 = vsel %vm273, %v305, 0.0
        %v308 = vadd.f32 %v306, %v307
        %309 = vadd.xlane.f32.xlu0 %v308
        %v310 = vpop.xlane.xlu0 %309
        %v311 = vrot.slane %v310, 4
        %v312 = vadd.f32 %v310, %v311
        %v313 = vrot.slane %v312, 2
        %v314 = vadd.f32 %v312, %v313
        %v315 = vrot.slane %v314, 1
        %v316 = vadd.f32 %v314, %v315
        %s317 = vtos %v316
        %vm318 = vcmp.eq.s32.totalorder %v260, 0
        %vm319 = vcmp.eq.s32.totalorder %v262, 0
        %vm320 = vmand %vm318, %vm319
        %v321 = vstv %s285
        %v322 = vsel %vm320, %v321, 0.0
        %vm323 = vcmp.eq.s32.totalorder %v262, 1
        %vm324 = vmand %vm318, %vm323
        %v325 = vstv %s301
        %v326 = vsel %vm324, %v325, %v322
        %vm327 = vcmp.eq.s32.totalorder %v262, 2
        %vm328 = vmand %vm318, %vm327
        %v329 = vstv %s317
        %v330 = vsel %vm328, %v329, %v326
        %vm331 = vcmp.eq.s32.totalorder %v255, 1
        %vm332 = vcmp.eq.s32.totalorder %v256, 1
        %vm333 = vcmp.eq.s32.totalorder %v257, 1
        %vm334 = vcmp.eq.s32.totalorder %v258, 1
        %vm335 = vmand %vm331, %vm333
        %vm336 = vmand %vm332, %vm334
        %v337 = vsel %vm335, 1, 0
        %v338 = vsel %vm336, 1, 0
        %v339 = vcvt.s32.f32 %v337
        %v340 = vcvt.s32.f32 %v338
        %v341 = vsel %vm273, %v339, 0.0
        %v342 = vsel %vm273, %v340, 0.0
        %v343 = vadd.f32 %v341, %v342
        %344 = vadd.xlane.f32.xlu0 %v343
        %v345 = vpop.xlane.xlu0 %344
        %v346 = vrot.slane %v345, 4
        %v347 = vadd.f32 %v345, %v346
        %v348 = vrot.slane %v347, 2
        %v349 = vadd.f32 %v347, %v348
        %v350 = vrot.slane %v349, 1
        %v351 = vadd.f32 %v349, %v350
        %s352 = vtos %v351
        %v353 = vsel %vm331, 1, 0
        %v354 = vsel %vm332, 1, 0
        %v355 = vcvt.s32.f32 %v353
        %v356 = vcvt.s32.f32 %v354
        %v357 = vsel %vm273, %v355, 0.0
        %v358 = vsel %vm273, %v356, 0.0
        %v359 = vadd.f32 %v357, %v358
        %360 = vadd.xlane.f32.xlu0 %v359
        %v361 = vpop.xlane.xlu0 %360
        %v362 = vrot.slane %v361, 4
        %v363 = vadd.f32 %v361, %v362
        %v364 = vrot.slane %v363, 2
        %v365 = vadd.f32 %v363, %v364
        %v366 = vrot.slane %v365, 1
        %v367 = vadd.f32 %v365, %v366
        %s368 = vtos %v367
        %v369 = vsel %vm333, 1, 0
        %v370 = vsel %vm334, 1, 0
        %v371 = vcvt.s32.f32 %v369
        %v372 = vcvt.s32.f32 %v370
        %v373 = vsel %vm273, %v371, 0.0
        %v374 = vsel %vm273, %v372, 0.0
        %v375 = vadd.f32 %v373, %v374
        %376 = vadd.xlane.f32.xlu0 %v375
        %v377 = vpop.xlane.xlu0 %376
        %v378 = vrot.slane %v377, 4
        %v379 = vadd.f32 %v377, %v378
        %v380 = vrot.slane %v379, 2
        %v381 = vadd.f32 %v379, %v380
        %v382 = vrot.slane %v381, 1
        %v383 = vadd.f32 %v381, %v382
        %s384 = vtos %v383
        %vm385 = vcmp.eq.s32.totalorder %v260, 1
        %vm386 = vmand %vm385, %vm319
        %v387 = vstv %s352
        %v388 = vsel %vm386, %v387, %v330
        %vm389 = vmand %vm385, %vm323
        %v390 = vstv %s368
        %v391 = vsel %vm389, %v390, %v388
        %vm392 = vmand %vm385, %vm327
        %v393 = vstv %s384
        %v394 = vsel %vm392, %v393, %v391
        %vm395 = vcmp.eq.s32.totalorder %v255, 2
        %vm396 = vcmp.eq.s32.totalorder %v256, 2
        %vm397 = vcmp.eq.s32.totalorder %v257, 2
        %vm398 = vcmp.eq.s32.totalorder %v258, 2
        %vm399 = vmand %vm395, %vm397
        %vm400 = vmand %vm396, %vm398
        %v401 = vsel %vm399, 1, 0
        %v402 = vsel %vm400, 1, 0
        %v403 = vcvt.s32.f32 %v401
        %v404 = vcvt.s32.f32 %v402
        %v405 = vsel %vm273, %v403, 0.0
        %v406 = vsel %vm273, %v404, 0.0
        %v407 = vadd.f32 %v405, %v406
        %408 = vadd.xlane.f32.xlu0 %v407
        %v409 = vpop.xlane.xlu0 %408
        %v410 = vrot.slane %v409, 4
        %v411 = vadd.f32 %v409, %v410
        %v412 = vrot.slane %v411, 2
        %v413 = vadd.f32 %v411, %v412
        %v414 = vrot.slane %v413, 1
        %v415 = vadd.f32 %v413, %v414
        %s416 = vtos %v415
        %v417 = vsel %vm395, 1, 0
        %v418 = vsel %vm396, 1, 0
        %v419 = vcvt.s32.f32 %v417
        %v420 = vcvt.s32.f32 %v418
        %v421 = vsel %vm273, %v419, 0.0
        %v422 = vsel %vm273, %v420, 0.0
        %v423 = vadd.f32 %v421, %v422
        %424 = vadd.xlane.f32.xlu0 %v423
        %v425 = vpop.xlane.xlu0 %424
        %v426 = vrot.slane %v425, 4
        %v427 = vadd.f32 %v425, %v426
        %v428 = vrot.slane %v427, 2
        %v429 = vadd.f32 %v427, %v428
        %v430 = vrot.slane %v429, 1
        %v431 = vadd.f32 %v429, %v430
        %s432 = vtos %v431
        %v433 = vsel %vm397, 1, 0
        %v434 = vsel %vm398, 1, 0
        %v435 = vcvt.s32.f32 %v433
        %v436 = vcvt.s32.f32 %v434
        %v437 = vsel %vm273, %v435, 0.0
        %v438 = vsel %vm273, %v436, 0.0
        %v439 = vadd.f32 %v437, %v438
        %440 = vadd.xlane.f32.xlu0 %v439
        %v441 = vpop.xlane.xlu0 %440
        %v442 = vrot.slane %v441, 4
        %v443 = vadd.f32 %v441, %v442
        %v444 = vrot.slane %v443, 2
        %v445 = vadd.f32 %v443, %v444
        %v446 = vrot.slane %v445, 1
        %v447 = vadd.f32 %v445, %v446
        %s448 = vtos %v447
        %vm449 = vcmp.eq.s32.totalorder %v260, 2
        %vm450 = vmand %vm449, %vm319
        %v451 = vstv %s416
        %v452 = vsel %vm450, %v451, %v394
        %vm453 = vmand %vm449, %vm323
        %v454 = vstv %s432
        %v455 = vsel %vm453, %v454, %v452
        %vm456 = vmand %vm449, %vm327
        %v457 = vstv %s448
        %v458 = vsel %vm456, %v457, %v455
        %459 = vst [vmem:[%s227] sm:$0xff] %v458
        %s460 = sand.u32 %s100, 1
        %s461 = scalar_lea.sflag [#allocation4], %s460
        %s462 = sand.u32 %s100, 1
        %s463 = smul.addr %s462, 8
        %s464 = scalar_lea.vmem [#allocation7], %s463
        // Predicated region
        $region37: #{tpu_custom_call.1} parent=27 // pred_check
          %p465 = pneg %p110
        $region38: #{tpu_custom_call.1} parent=27 // pred_check_branch
          %467 = sbr.rel (%p465) target = $region40
        $region39: #{tpu_custom_call.1} parent=27 // pred_region
          %469 = vsyncadd %s461, 0
          %s470 = sadd.s32 %s27, %s26
          %s471 = smul.addr %s470, 8
          %s472 = scalar_lea.hbm %s2, %s471
          %s474 = sshll.u32 %s464, 4
          %s475 = int_to_ptr.vmem [resolvable:$true] %s474
          %s476 = sshll.u32 %s472, 4
          %s477 = int_to_ptr.hbm [resolvable:$true] %s476
          %479 = dma.vmem_to_hbm [thread:$0]  %s475, 128, %s477, %s461
        $region40: #{tpu_custom_call.1} parent=27 // pred_fallthru
          _
      $region28: #{tpu_custom_call.1} parent=5 // pred_fallthru
        _
      %p480 = scmp.le.s32.totalorder 2, %s17
      // Predicated region
      $region41: #{tpu_custom_call.1} parent=5 // pred_check
        %p481 = pneg %p480
      $region42: #{tpu_custom_call.1} parent=5 // pred_check_branch
        %483 = sbr.rel (%p481) target = $region44
      $region43: #{tpu_custom_call.1} parent=5 // pred_region
        %s484 = ssub.s32 %s17, 2
        // Predicated region
        $region45: #{tpu_custom_call.1} parent=43 // pred_check
          %p485 = pneg %p116
        $region46: #{tpu_custom_call.1} parent=43 // pred_check_branch
          %487 = sbr.rel (%p485) target = $region48
        $region47: #{tpu_custom_call.1} parent=43 // pred_region
          %s488 = sand.u32 %s101, 1
          %s489 = scalar_lea.sflag [#allocation4], %s488
          %s490 = sand.u32 %s101, 1
          %s491 = smul.addr %s490, 8
          %s492 = scalar_lea.vmem [#allocation7], %s491
          %494 = dma.done %s489, 128
        $region48: #{tpu_custom_call.1} parent=43 // pred_fallthru
          _
      $region44: #{tpu_custom_call.1} parent=5 // pred_fallthru
        _
    $region6: #{tpu_custom_call.1} parent=1 // loop_footer
      %s21 = sadd.s32 1, %s17
    $region7: #{tpu_custom_call.1} parent=1 // loop_footer_branch
      %16 = sbr.rel target = $region3
    $region8: #{tpu_custom_call.1} parent=1 // loop_exit
      _
    %495 = vsyncpa [#allocation3], 1
    %s496 = scalar_lea.sflag [#allocation3], 1
    %497 = vsyncpa %s496, 1
    %498 = vsyncpa [#allocation6], 1
    %s499 = scalar_lea.sflag [#allocation6], 1
    %500 = vsyncpa %s499, 1
    %501 = vsyncpa [#allocation4], 1
    %s502 = scalar_lea.sflag [#allocation4], 1
    %503 = vsyncpa %s502, 1

</llo_original>
